<compile_context>
chip_gen: v6e
topology: v6e:2x2x1
jax: 0.10.0
libtpu: 0.0.40
codegen_flags: <defaults>
</compile_context>

<pallas_src>
import numpy as np
import jax
import jax.numpy as jnp
from jax.experimental import pallas as pl
from jax.experimental.pallas import tpu as pltpu


# ----------------------------------------------------------------------------
# Kernel: one lane-dense (tile_rows, dim) tile, bias broadcast over sublanes.
# ----------------------------------------------------------------------------
def _bias_kernel(x_ref, b_ref, o_ref):
    # x_ref: (tile_rows, dim)   b_ref: (1, dim)   o_ref: (tile_rows, dim)
    o_ref[...] = (x_ref[...] + b_ref[...]).astype(o_ref.dtype)


def _pick_row_tile(rows, max_tile=512):
    """Largest multiple-of-8 divisor of `rows` that is <= max_tile (keeps the
    sublane-side (8,128) block constraint); single full block if rows are small
    or no such divisor exists."""
    if rows <= max_tile:
        return rows
    for t in range(max_tile, 7, -1):
        if t % 8 == 0 and rows % t == 0:
            return t
    return rows


def bias_layer_apply(x, bias):
    """BiasLayer.forward: x (..., dim) + bias (dim,) -> same shape as x."""
    orig_shape = x.shape
    dim = orig_shape[-1]
    rows = int(np.prod(orig_shape[:-1])) if len(orig_shape) > 1 else 1

    x2 = x.reshape(rows, dim)      # row-major collapse: no transpose, no HBM round-trip
    b2 = bias.reshape(1, dim)

    tile_rows = _pick_row_tile(rows)
    grid = (rows // tile_rows,)

    out = pl.pallas_call(
        _bias_kernel,
        out_shape=jax.ShapeDtypeStruct((rows, dim), x.dtype),
        grid=grid,
        in_specs=[
            # activations: tiled along rows, full (lane-dense) feature dim
            pl.BlockSpec((tile_rows, dim), lambda i: (i, 0)),
            # bias: index_map ignores the grid index -> stays resident in VMEM
            pl.BlockSpec((1, dim), lambda i: (0, 0)),
        ],
        out_specs=pl.BlockSpec((tile_rows, dim), lambda i: (i, 0)),
        compiler_params=pltpu.CompilerParams(
            dimension_semantics=("parallel",)),
    )(x2, b2)

    return out.reshape(orig_shape)


if __name__ == "__main__":
    key = jax.random.PRNGKey(0)

    # Small case: x (2, 8, 256) + bias (256,)  -> one lane-dense grid step.
    dim = 256
    key, kx, kb = jax.random.split(key, 3)
    x_small = jax.random.normal(kx, (2, 8, dim), jnp.float32)
    bias = jax.random.normal(kb, (dim,), jnp.float32)

    out_small = jax.block_until_ready(bias_layer_apply(x_small, bias))
    ref_small = x_small + bias
    assert out_small.shape == x_small.shape
    np.testing.assert_allclose(np.asarray(out_small), np.asarray(ref_small),
                               rtol=1e-6, atol=1e-6)

    # Larger case exercises the batch-tiled "parallel" grid (4 steps of 512 rows)
    # with the bias block kept resident across steps.
    key, kx2 = jax.random.split(key)
    x_big = jax.random.normal(kx2, (2048, dim), jnp.float32)
    out_big = jax.block_until_ready(bias_layer_apply(x_big, bias))
    ref_big = x_big + bias
    np.testing.assert_allclose(np.asarray(out_big), np.asarray(ref_big),
                               rtol=1e-6, atol=1e-6)

    print("KERNEL_OK")
</pallas_src>

<mosaic_0001>
module attributes {stable_mosaic.version = 11 : i64} {
  func.func @_bias_kernel(%arg0: i32, %arg1: memref<16x256xf32, #tpu.memory_space<vmem>>, %arg2: memref<1x256xf32, #tpu.memory_space<vmem>>, %arg3: memref<16x256xf32, #tpu.memory_space<vmem>>) attributes {dimension_semantics = [#tpu.dimension_semantics<parallel>], iteration_bounds = array<i64: 1>, scalar_prefetch = 0 : i64, scratch_operands = 0 : i64, tpu.core_type = #tpu.core_type<tc>, window_params = [{transform_indices = @transform_0, window_bounds = array<i64: 16, 256>}, {pipeline_mode = #tpu.pipeline_mode<synchronous>, transform_indices = @transform_1, window_bounds = array<i64: 1, 256>}, {transform_indices = @transform_2, window_bounds = array<i64: 16, 256>}]} {
    %c0 = arith.constant 0 : index
    %c0_0 = arith.constant 0 : index
    %0 = vector.load %arg1[%c0, %c0_0] : memref<16x256xf32, #tpu.memory_space<vmem>>, vector<16x256xf32>
    %c0_1 = arith.constant 0 : index
    %c0_2 = arith.constant 0 : index
    %1 = vector.load %arg2[%c0_1, %c0_2] : memref<1x256xf32, #tpu.memory_space<vmem>>, vector<1x256xf32>
    %2 = vector.broadcast %1 : vector<1x256xf32> to vector<16x256xf32>
    %3 = arith.addf %0, %2 : vector<16x256xf32>
    %c0_3 = arith.constant 0 : index
    %c0_4 = arith.constant 0 : index
    %4 = vector.load %arg3[%c0_3, %c0_4] : memref<16x256xf32, #tpu.memory_space<vmem>>, vector<16x256xf32>
    tpu.vector_store %arg3[%c0_3, %c0_4], %3 {strides = array<i32>} : memref<16x256xf32, #tpu.memory_space<vmem>>, vector<16x256xf32>,
    return
  }
  func.func @transform_0(%arg0: i32) -> (i32, i32) {
    %c0_i32 = arith.constant 0 : i32
    %c0_i32_0 = arith.constant 0 : i32
    return %arg0, %c0_i32 : i32, i32
  }
  func.func @transform_1(%arg0: i32) -> (i32, i32) {
    %c0_i32 = arith.constant 0 : i32
    %c0_i32_0 = arith.constant 0 : i32
    %c0_i32_1 = arith.constant 0 : i32
    return %c0_i32, %c0_i32_0 : i32, i32
  }
  func.func @transform_2(%arg0: i32) -> (i32, i32) {
    %c0_i32 = arith.constant 0 : i32
    %c0_i32_0 = arith.constant 0 : i32
    return %arg0, %c0_i32 : i32, i32
  }
}

</mosaic_0001>

<llo_original>
// kernel: tpu_custom_call.1
$region0: #{tpu_custom_call.1}
  #allocation0 [shape = 'u32[]', space=smem, size = 0x4, offset = 0x4, fixed_abs, tag = 'smem constant byte address 0x4 - core index']
  #allocation1 [shape = 'u32[144,128]{1,0:T(1,128)}', space=vmem, size = 0x12000, scoped, tag = 'internal scratch']
  %s0 = inlined_call_operand.hbm [shape: f32[16,256], index: 0, kind: input, shape index: {}]
  %s1 = inlined_call_operand.hbm [shape: f32[1,256], index: 1, kind: input, shape index: {}]
  %s2 = inlined_call_operand.hbm [shape: f32[16,256], index: 2, kind: output, shape index: {}]
  %s3 = sld [smem:[#allocation0]]
  $region26: #{tpu_custom_call.1} parent=0
    _
  %s5 = ssub.s32 1, %s3
  %s6 = scalar_select 0, %s5, %s3
  $region1: #{tpu_custom_call.1} parent=0
    #allocation2 [shape = 'u8[16384]{0}', space=vmem, size = 0x4000, scoped, tag = 'input window, operand 0, single buffered']
    #allocation3 [shape = 's32[1]{0}', space=sflag, size = 0x4, scoped, tag = 'scoped memory for tpu_custom_call.1']
    #allocation4 [shape = 's32[1]{0}', space=sflag, size = 0x4, scoped, tag = 'scoped memory for tpu_custom_call.1']
    #allocation5 [shape = 'u8[1024]{0}', space=vmem, size = 0x400, scoped, tag = 'input window, operand 1, single buffered']
    #allocation6 [shape = 's32[1]{0}', space=sflag, size = 0x4, scoped, tag = 'scoped memory for tpu_custom_call.1']
    #allocation7 [shape = 'u8[16384]{0}', space=vmem, size = 0x4000, scoped, tag = 'output window, operand 0, single buffered']
    %7 = vsyncpa [#allocation3], 0
    %8 = vsyncpa [#allocation6], 0
    %9 = vsyncpa [#allocation4], 0
    // Predicated region
    $region2: #{tpu_custom_call.1} parent=1 // pred_check
      _
    $region3: #{tpu_custom_call.1} parent=1 // pred_check_branch
      %11 = sbr.rel (0) target = $region5
    $region4: #{tpu_custom_call.1} parent=1 // pred_region
      %s13 = ssub.s32 512, 512
      %14 = vsyncadd [#allocation3], %s13
      %s15 = sshll.u32 [#allocation2], 4
      %s16 = int_to_ptr.vmem [resolvable:$true] %s15
      %21 = dma.hbm_to_vmem [thread:$0]  %s0, 512, %s16, [#allocation3], 256, 256, 16
    $region5: #{tpu_custom_call.1} parent=1 // pred_fallthru
      _
    // Predicated region
    $region6: #{tpu_custom_call.1} parent=1 // pred_check
      _
    $region7: #{tpu_custom_call.1} parent=1 // pred_check_branch
      %23 = sbr.rel (0) target = $region9
    $region8: #{tpu_custom_call.1} parent=1 // pred_region
      %s25 = ssub.s32 32, 32
      %26 = vsyncadd [#allocation6], %s25
      %s28 = sshll.u32 [#allocation5], 4
      %s29 = int_to_ptr.vmem [resolvable:$true] %s28
      %31 = dma.hbm_to_vmem [thread:$0]  %s1, 32, %s29, [#allocation6]
    $region9: #{tpu_custom_call.1} parent=1 // pred_fallthru
      _
    // Predicated region
    $region10: #{tpu_custom_call.1} parent=1 // pred_check
      _
    $region11: #{tpu_custom_call.1} parent=1 // pred_check_branch
      %33 = sbr.rel (0) target = $region13
    $region12: #{tpu_custom_call.1} parent=1 // pred_region
      %34 = dma.done [#allocation3], 512
    $region13: #{tpu_custom_call.1} parent=1 // pred_fallthru
      _
    // Predicated region
    $region14: #{tpu_custom_call.1} parent=1 // pred_check
      _
    $region15: #{tpu_custom_call.1} parent=1 // pred_check_branch
      %36 = sbr.rel (0) target = $region17
    $region16: #{tpu_custom_call.1} parent=1 // pred_region
      %37 = dma.done [#allocation6], 32
    $region17: #{tpu_custom_call.1} parent=1 // pred_fallthru
      _
    %v38 = vld [vmem:[#allocation2] sm:$0xff]
    %v39 = vld [vmem:[#allocation2 + $0x8] sm:$0xff]
    %v40 = vld [vmem:[#allocation2 + $0x10] sm:$0xff]
    %v41 = vld [vmem:[#allocation2 + $0x18] sm:$0xff]
    %v42 = vld [vmem:[#allocation5] sm:$0x3]
    %v44 = vlaneseq
    %v45 = vshrl.u32 %v44, 7
    %v46 = vsub.s32 0, %v45
    %v47 = vrot.slane %v42, %v46
    %v48 = vlaneseq
    %v49 = vshrl.u32 %v48, 7
    %v50 = vsub.s32 1, %v49
    %v51 = vrot.slane %v42, %v50
    %v54 = vadd.f32 %v38, %v47
    %v55 = vadd.f32 %v39, %v51
    %v56 = vadd.f32 %v40, %v47
    %v57 = vadd.f32 %v41, %v51
    %58 = vst [vmem:[#allocation7] sm:$0xff] %v54
    %59 = vst [vmem:[#allocation7 + $0x8] sm:$0xff] %v55
    %60 = vst [vmem:[#allocation7 + $0x10] sm:$0xff] %v56
    %61 = vst [vmem:[#allocation7 + $0x18] sm:$0xff] %v57
    // Predicated region
    $region18: #{tpu_custom_call.1} parent=1 // pred_check
      _
    $region19: #{tpu_custom_call.1} parent=1 // pred_check_branch
      %63 = sbr.rel (0) target = $region21
    $region20: #{tpu_custom_call.1} parent=1 // pred_region
      %s65 = ssub.s32 512, 512
      %66 = vsyncadd [#allocation4], %s65
      %s67 = sshll.u32 [#allocation7], 4
      %s68 = int_to_ptr.vmem [resolvable:$true] %s67
      %73 = dma.vmem_to_hbm [thread:$0]  %s68, 512, %s2, [#allocation4], 256, 256, 16
    $region21: #{tpu_custom_call.1} parent=1 // pred_fallthru
      _
    // Predicated region
    $region22: #{tpu_custom_call.1} parent=1 // pred_check
      _
    $region23: #{tpu_custom_call.1} parent=1 // pred_check_branch
      %75 = sbr.rel (0) target = $region25
    $region24: #{tpu_custom_call.1} parent=1 // pred_region
      %76 = dma.done [#allocation4], 512
    $region25: #{tpu_custom_call.1} parent=1 // pred_fallthru
      _
    %77 = vsyncpa [#allocation3], 1
    %78 = vsyncpa [#allocation6], 1
    %79 = vsyncpa [#allocation4], 1

</llo_original>
